<compile_context>
chip_gen: v7x
topology: tpu7x:2x2x1
jax: 0.10.0
libtpu: 0.0.40
codegen_flags: <defaults>
</compile_context>

<pallas_src>
import functools
import math

import jax
import jax.numpy as jnp
from jax.experimental import pallas as pl
from jax.experimental.pallas import tpu as pltpu


_LANE = 128
_SUBLANE = 8


def _pos_enc_kernel(x_ref, pe_ref, o_ref, *, scale):
    # x_ref:  (TR, TL) tile of the [B, S*D] slab
    # pe_ref: (1,  TL) pre-scaled positional-encoding row (broadcasts over TR)
    # `scale` is a Python float literal (not a captured jax constant).
    o_ref[...] = (x_ref[...] * scale + pe_ref[...]).astype(o_ref.dtype)


def _vmem_budget_bytes():
    """Return (vmem_limit_bytes, per-block byte budget), generation aware."""
    try:
        vmem = int(pltpu.get_tpu_info().vmem_capacity_bytes)
    except Exception:
        vmem = 64 * 1024 * 1024          # unknown -> assume the smallest (v7x)
    if vmem >= 100 * 1024 * 1024:        # v5e / v6e: 128 MiB physical VMEM
        return 80 * 1024 * 1024, 16 * 1024 * 1024
    # v7x: 64 MiB physical per TensorCore
    return 48 * 1024 * 1024, 8 * 1024 * 1024


def _choose_tiles(B, flat, itemsize, block_bytes):
    """Pick (tr, tl): lane tile is a wide multiple of 128 (or the full row),
    row tile a multiple of 8 (or the full batch). cdiv grid handles tails."""
    block_elems = max(block_bytes // itemsize, _SUBLANE * _LANE)
    min_rows = max(1, min(B, _SUBLANE))
    lane_cap = max(_LANE, block_elems // min_rows)

    if flat <= lane_cap:
        tl = flat                                  # full-extent dim: always legal
    else:
        tl = (lane_cap // _LANE) * _LANE           # aligned; ragged tail via cdiv

    tr_budget = max(1, block_elems // tl)
    if B <= tr_budget:
        tr = B                                     # full-extent dim: always legal
    else:
        tr = max(_SUBLANE, (tr_budget // _SUBLANE) * _SUBLANE)
    return tr, tl


def enhanced_positional_encoding(x, pe_full, alpha, beta):
    """Eval-mode forward. x: [B, S, D]; pe_full: [max_len, D]; alpha, beta scalars."""
    B, S, D = x.shape
    alpha = jnp.asarray(alpha, jnp.float32)
    beta = jnp.asarray(beta, jnp.float32)

    # Fold the two learnable scalars into the (tiny, [S, D]) positional table
    # once in plain JAX; cast to x.dtype so the kernel computes natively
    # (bf16 in / bf16 compute, f32 in / f32 compute).
    pe_scaled = (alpha * pe_full[:S, :].astype(jnp.float32) + beta).astype(x.dtype)

    flat = S * D
    x2 = x.reshape(B, flat)
    pe2 = pe_scaled.reshape(1, flat)

    itemsize = jnp.dtype(x.dtype).itemsize
    vmem_limit, block_bytes = _vmem_budget_bytes()
    tr, tl = _choose_tiles(B, flat, itemsize, block_bytes)

    n_row = pl.cdiv(B, tr)
    n_lane = pl.cdiv(flat, tl)

    # Avoid a degenerate 1x1 grid for non-trivial inputs so megacore (v7x) can
    # shard across both TensorCores; one extra grid step (~0.35 us) is cheap.
    if n_row * n_lane == 1 and tr * tl * itemsize >= (1 << 20) and tl >= 2 * _LANE:
        tl = ((tl // 2 + _LANE - 1) // _LANE) * _LANE
        n_lane = pl.cdiv(flat, tl)

    # Lane axis OUTERMOST: the pe row's block index (0, j) is constant across
    # all inner row steps, so it stays resident in VMEM (no per-step re-DMA).
    grid = (n_lane, n_row)

    kernel = functools.partial(_pos_enc_kernel, scale=float(math.sqrt(D)))

    out2 = pl.pallas_call(
        kernel,
        out_shape=jax.ShapeDtypeStruct((B, flat), x.dtype),
        grid_spec=pltpu.PrefetchScalarGridSpec(
            num_scalar_prefetch=0,
            grid=grid,
            in_specs=[
                pl.BlockSpec((tr, tl), lambda j, i: (i, j)),   # x tile
                pl.BlockSpec((1, tl), lambda j, i: (0, j)),    # pe row (resident)
            ],
            out_specs=pl.BlockSpec((tr, tl), lambda j, i: (i, j)),
        ),
        compiler_params=pltpu.CompilerParams(
            dimension_semantics=("parallel", "parallel"),
            vmem_limit_bytes=vmem_limit,
        ),
        cost_estimate=pl.CostEstimate(
            flops=2 * B * flat,
            transcendentals=0,
            bytes_accessed=(2 * B * flat + flat) * itemsize,
        ),
    )(x2, pe2)

    # TODO(synk): training-mode dropout would need pltpu.prng_seed /
    #             pltpu.prng_random_bits masking inside the kernel; eval mode
    #             (identity) is implemented here.
    return out2.reshape(B, S, D)


def make_pe_table(max_len, d_model):
    """sin/cos buffer pe[:, 0, :] of shape [max_len, d_model] (even d_model)."""
    position = jnp.arange(max_len, dtype=jnp.float32)[:, None]          # [L, 1]
    div_term = jnp.exp(jnp.arange(0, d_model, 2, dtype=jnp.float32)
                       * (-math.log(10000.0) / d_model))                # [D/2]
    angles = position * div_term                                        # [L, D/2]
    pe = jnp.zeros((max_len, d_model), dtype=jnp.float32)
    pe = pe.at[:, 0::2].set(jnp.sin(angles))
    pe = pe.at[:, 1::2].set(jnp.cos(angles))
    return pe


def reference(x, pe_full, alpha, beta):
    B, S, D = x.shape
    pe = pe_full[:S, :][None, :, :]
    return x * math.sqrt(D) + alpha * pe + beta


if __name__ == "__main__":
    key = jax.random.PRNGKey(0)
    B, S, D = 2, 8, 32
    max_len = 64

    x = jax.random.normal(key, (B, S, D), dtype=jnp.float32)
    pe_full = make_pe_table(max_len, D)

    # Module-default parameters (nn.Parameter(torch.ones(1) / torch.zeros(1))).
    out = enhanced_positional_encoding(x, pe_full, 1.0, 0.0)
    out = jax.block_until_ready(out)
    ref = reference(x, pe_full, 1.0, 0.0)
    assert out.shape == (B, S, D)
    assert jnp.allclose(out, ref, atol=1e-5, rtol=1e-5), "mismatch vs reference"

    # Non-trivial learnable scalars exercise the pre-scaled pe path.
    out2 = jax.block_until_ready(
        enhanced_positional_encoding(x, pe_full, 1.3, -0.25))
    ref2 = reference(x, pe_full, 1.3, -0.25)
    assert jnp.allclose(out2, ref2, atol=1e-5, rtol=1e-5), "mismatch (alpha/beta)"

    # Ragged shape exercises the cdiv grid / non-divisible tile path.
    B3, S3, D3 = 3, 7, 32
    x3 = jax.random.normal(jax.random.PRNGKey(1), (B3, S3, D3), dtype=jnp.float32)
    pe3 = make_pe_table(max_len, D3)
    out3 = jax.block_until_ready(enhanced_positional_encoding(x3, pe3, 0.7, 0.1))
    ref3 = reference(x3, pe3, 0.7, 0.1)
    assert jnp.allclose(out3, ref3, atol=1e-5, rtol=1e-5), "mismatch (ragged)"

    print("KERNEL_OK")
</pallas_src>

<mosaic_0001>
module attributes {stable_mosaic.version = 11 : i64} {
  func.func @_pos_enc_kernel(%arg0: i32, %arg1: i32, %arg2: memref<2x256xf32, #tpu.memory_space<vmem>>, %arg3: memref<1x256xf32, #tpu.memory_space<vmem>>, %arg4: memref<2x256xf32, #tpu.memory_space<vmem>>) attributes {dimension_semantics = [#tpu.dimension_semantics<parallel>, #tpu.dimension_semantics<parallel>], iteration_bounds = array<i64: 1, 1>, scalar_prefetch = 0 : i64, scratch_operands = 0 : i64, tpu.core_type = #tpu.core_type<tc>, window_params = [{transform_indices = @transform_0, window_bounds = array<i64: 2, 256>}, {transform_indices = @transform_1, window_bounds = array<i64: 1, 256>}, {transform_indices = @transform_2, window_bounds = array<i64: 2, 256>}]} {
    %c0 = arith.constant 0 : index
    %c0_0 = arith.constant 0 : index
    %0 = vector.load %arg2[%c0, %c0_0] : memref<2x256xf32, #tpu.memory_space<vmem>>, vector<2x256xf32>
    %cst = arith.constant 5.65685415 : f32
    %1 = vector.broadcast %cst : f32 to vector<2x256xf32>
    %2 = arith.mulf %0, %1 : vector<2x256xf32>
    %c0_1 = arith.constant 0 : index
    %c0_2 = arith.constant 0 : index
    %3 = vector.load %arg3[%c0_1, %c0_2] : memref<1x256xf32, #tpu.memory_space<vmem>>, vector<1x256xf32>
    %4 = vector.broadcast %3 : vector<1x256xf32> to vector<2x256xf32>
    %5 = arith.addf %2, %4 : vector<2x256xf32>
    %c0_3 = arith.constant 0 : index
    %c0_4 = arith.constant 0 : index
    %6 = vector.load %arg4[%c0_3, %c0_4] : memref<2x256xf32, #tpu.memory_space<vmem>>, vector<2x256xf32>
    tpu.vector_store %arg4[%c0_3, %c0_4], %5 {strides = array<i32>} : memref<2x256xf32, #tpu.memory_space<vmem>>, vector<2x256xf32>,
    return
  }
  func.func @transform_0(%arg0: i32, %arg1: i32) -> (i32, i32) {
    %c0_i32 = arith.constant 0 : i32
    return %arg1, %arg0 : i32, i32
  }
  func.func @transform_1(%arg0: i32, %arg1: i32) -> (i32, i32) {
    %c0_i32 = arith.constant 0 : i32
    %c0_i32_0 = arith.constant 0 : i32
    return %c0_i32, %arg0 : i32, i32
  }
  func.func @transform_2(%arg0: i32, %arg1: i32) -> (i32, i32) {
    %c0_i32 = arith.constant 0 : i32
    return %arg1, %arg0 : i32, i32
  }
}

</mosaic_0001>

<llo_original>
// kernel: tpu_custom_call.1
$region0: #{tpu_custom_call.1}
  #allocation0 [shape = 'u32[]', space=smem, size = 0x4, offset = 0x4, fixed_abs, tag = 'smem constant byte address 0x4 - core index']
  #allocation1 [shape = 'u32[144,128]{1,0:T(1,128)}', space=vmem, size = 0x12000, scoped, tag = 'internal scratch']
  %s0 = inlined_call_operand.hbm [shape: f32[2,256], index: 0, kind: input, shape index: {}]
  %s1 = inlined_call_operand.vmem [shape: f32[1,256], index: 1, kind: input, shape index: {}]
  %s2 = inlined_call_operand.hbm [shape: f32[2,256], index: 2, kind: output, shape index: {}]
  %s3 = sld [smem:[#allocation0]]
  $region22: #{tpu_custom_call.1} parent=0
    _
  %s5 = ssub.s32 1, %s3
  %s6 = scalar_select 0, %s5, %s3
  $region1: #{tpu_custom_call.1} parent=0
    #allocation2 [shape = 'u8[2048]{0}', space=vmem, size = 0x800, scoped, tag = 'input window, operand 0, single buffered']
    #allocation3 [shape = 's32[1]{0}', space=sflag, size = 0x4, scoped, tag = 'scoped memory for tpu_custom_call.1']
    #allocation4 [shape = 's32[1]{0}', space=sflag, size = 0x4, scoped, tag = 'scoped memory for tpu_custom_call.1']
    #allocation5 [shape = 'u8[2048]{0}', space=vmem, size = 0x800, scoped, tag = 'output window, operand 0, single buffered']
    %7 = vsyncpa [#allocation3], 0
    %8 = vsyncpa [#allocation4], 0
    // Predicated region
    $region2: #{tpu_custom_call.1} parent=1 // pred_check
      _
    $region3: #{tpu_custom_call.1} parent=1 // pred_check_branch
      %10 = sbr.rel (0) target = $region5
    $region4: #{tpu_custom_call.1} parent=1 // pred_region
      %s12 = ssub.s32 64, 64
      %13 = vsyncadd [#allocation3], %s12
      %s15 = sshll.u32 [#allocation2], 4
      %s16 = int_to_ptr.vmem [resolvable:$true] %s15
      %18 = dma.hbm_to_vmem [thread:$0]  %s0, 64, %s16, [#allocation3]
    $region5: #{tpu_custom_call.1} parent=1 // pred_fallthru
      _
    // Predicated region
    $region6: #{tpu_custom_call.1} parent=1 // pred_check
      _
    $region7: #{tpu_custom_call.1} parent=1 // pred_check_branch
      %20 = sbr.rel (0) target = $region9
    $region8: #{tpu_custom_call.1} parent=1 // pred_region
      _
    $region9: #{tpu_custom_call.1} parent=1 // pred_fallthru
      _
    // Predicated region
    $region10: #{tpu_custom_call.1} parent=1 // pred_check
      _
    $region11: #{tpu_custom_call.1} parent=1 // pred_check_branch
      %22 = sbr.rel (0) target = $region13
    $region12: #{tpu_custom_call.1} parent=1 // pred_region
      %23 = dma.done [#allocation3], 64
    $region13: #{tpu_custom_call.1} parent=1 // pred_fallthru
      _
    %v24 = vld [vmem:[#allocation2] sm:$0xf]
    %v25 = vmul.f32 %v24, 5.656854
    %v26 = vld [vmem:[%s1] sm:$0x3]
    %v28 = vlaneseq
    %v29 = vshrl.u32 %v28, 7
    %v30 = vsub.s32 0, %v29
    %v31 = vrot.slane %v26, %v30
    %v32 = vlaneseq
    %v33 = vshrl.u32 %v32, 7
    %v34 = vsub.s32 1, %v33
    %v35 = vrot.slane %v26, %v34
    %v36 = vcombine.low %v31, %v35
    %v38 = vunpack.c.l.s4 1983009808
    %v39 = vunpack.c.0.s8 %v38
    %v40 = vlaneseq
    %v41 = vshrl.u32 %v40, 7
    %v42 = vsub.s32 %v39, %v41
    %v43 = vrot.slane %v36, %v42
    %v45 = vadd.f32 %v25, %v43
    %46 = vst [vmem:[#allocation5] sm:$0xf] %v45
    // Predicated region
    $region14: #{tpu_custom_call.1} parent=1 // pred_check
      _
    $region15: #{tpu_custom_call.1} parent=1 // pred_check_branch
      %48 = sbr.rel (0) target = $region17
    $region16: #{tpu_custom_call.1} parent=1 // pred_region
      %s50 = ssub.s32 64, 64
      %51 = vsyncadd [#allocation4], %s50
      %s53 = sshll.u32 [#allocation5], 4
      %s54 = int_to_ptr.vmem [resolvable:$true] %s53
      %56 = dma.vmem_to_hbm [thread:$0]  %s54, 64, %s2, [#allocation4]
    $region17: #{tpu_custom_call.1} parent=1 // pred_fallthru
      _
    // Predicated region
    $region18: #{tpu_custom_call.1} parent=1 // pred_check
      _
    $region19: #{tpu_custom_call.1} parent=1 // pred_check_branch
      %58 = sbr.rel (0) target = $region21
    $region20: #{tpu_custom_call.1} parent=1 // pred_region
      %59 = dma.done [#allocation4], 64
    $region21: #{tpu_custom_call.1} parent=1 // pred_fallthru
      _
    %60 = vsyncpa [#allocation3], 1
    %61 = vsyncpa [#allocation4], 1

</llo_original>
